<compile_context>
chip_gen: v7x
topology: tpu7x:2x2x1
jax: 0.10.0
libtpu: 0.0.40
codegen_flags: <defaults>
</compile_context>

<pallas_src>
from functools import partial

import jax
import jax.numpy as jnp
import numpy as np
from jax.experimental import pallas as pl
from jax.experimental.pallas import tpu as pltpu


# --------------------------------------------------------------------------- #
# Kernel
# --------------------------------------------------------------------------- #
def conv_lif_kernel(x_ref, w_ref, o_ref, v_ref, *,
                    inv_tau, v_th, TT, tb, Cin, Cout, L,
                    mxu_dtype, approx_recip):
    # Reset the LIF membrane potential at the first time-block of every batch tile.
    @pl.when(pl.program_id(1) == 0)
    def _():
        v_ref[...] = jnp.zeros_like(v_ref)

    # ---- Conv1d(k=3, padding=1, bias=False) for all TT local time steps at once ----
    # One wide, lane-dense MXU contraction against the banded (Toeplitz) weight:
    #   (TT*tb, Cin*L) @ (Cin*L, Cout*L) -> (TT*tb, Cout*L)
    # The zero band entries encode the 'same' padding, so no halo build (concatenate /
    # roll) is needed and the result lands directly in the lane-dense store layout.
    x = x_ref[...].reshape(TT * tb, Cin * L).astype(mxu_dtype)   # cast x once per block
    y = jnp.dot(x, w_ref[...], preferred_element_type=jnp.float32)

    # TODO(synk): MaxPool1d(kernel_size=1) and Dropout are identities in eval mode; omitted.

    # ---- Min-max normalization over the length axis (PyTorch dim=3) ----
    y = y.reshape(TT * tb, Cout, L)
    y_min = jnp.min(y, axis=-1, keepdims=True)
    y_max = jnp.max(y, axis=-1, keepdims=True)
    inv = pl.reciprocal(y_max - y_min + 1e-12, approx=approx_recip)   # EUP slot
    yn = (y - y_min) * inv                                            # (TT*tb, Cout, L) f32

    # ---- MultiStepLIFNode(tau, v_th=0.5, v_reset=0, decay_input=True) ----
    # TODO(synk): surrogate.Sigmoid only shapes the backward pass; forward is the hard threshold.
    v = v_ref[...]                                                    # (tb, Cout, L) f32
    for tt in range(TT):                 # static unroll; TT kept small by the tile picker
        v = v + (yn[tt * tb:(tt + 1) * tb] - v) * inv_tau
        spike = v >= v_th
        o_ref[tt] = spike.astype(o_ref.dtype).reshape(tb, Cout * L)   # lane-dense store
        v = jnp.where(spike, 0.0, v)
    v_ref[...] = v


# --------------------------------------------------------------------------- #
# Wrapper-side helpers
# --------------------------------------------------------------------------- #
def _band_weight(w, L, dtype):
    """Fold Conv1d(k=3, padding=1, bias=False) into a banded (Toeplitz) matrix.

    w: (Cout, Cin, 3) -> W: (Cin*L, Cout*L) with
      W[i*L + l_in, o*L + l_out] = w[o, i, l_in - l_out + 1]  if |l_in - l_out| <= 1 else 0
    so that  y[b, o*L + l] = x_flat[b, :] @ W[:, o*L + l]  equals the 'same'-padded conv.
    """
    Cout, Cin, K = w.shape
    li = jnp.arange(L)[:, None]            # input position  l_in
    lo = jnp.arange(L)[None, :]            # output position l_out
    k = li - lo + 1                        # conv tap index
    valid = (k >= 0) & (k < K)
    band = w[:, :, jnp.clip(k, 0, K - 1)] * valid[None, None].astype(w.dtype)  # (Cout,Cin,L,L)
    return jnp.transpose(band, (1, 2, 0, 3)).reshape(Cin * L, Cout * L).astype(dtype)


def _vmem_capacity_bytes(default_bytes=64 << 20):
    """Per-core VMEM capacity; conservative (v7x-sized) fallback if the query fails."""
    try:
        return int(pltpu.get_tpu_info().vmem_capacity_bytes)
    except Exception:
        return default_bytes


def _round_up(n, m):
    return ((n + m - 1) // m) * m


def _padded_vmem_bytes(shape, dtype):
    """Approximate VMEM residency of one buffer, with (sublane, 128)-lane tile padding."""
    itemsize = jnp.dtype(dtype).itemsize
    sublanes = 8 * max(1, 4 // itemsize)   # 8 rows f32, 16 rows bf16, ...
    shape = tuple(int(d) for d in shape)
    if len(shape) == 1:
        lead, rows, lanes = 1, 1, shape[0]
    else:
        rows, lanes = shape[-2], shape[-1]
        lead = 1
        for d in shape[:-2]:
            lead *= d
    return lead * _round_up(max(rows, 1), sublanes) * _round_up(max(lanes, 1), 128) * itemsize


def _vmem_estimate(tb, TT, Cin, Cout, L, x_dtype, out_dtype, mxu_dtype):
    """Resident bytes per grid step: double-buffered I/O + weight + scratch + temporaries."""
    f32 = jnp.float32
    est = 0
    est += 2 * _padded_vmem_bytes((TT, tb, Cin * L), x_dtype)      # input block (2 buffers)
    est += 2 * _padded_vmem_bytes((TT, tb, Cout * L), out_dtype)   # output block (2 buffers)
    est += 2 * _padded_vmem_bytes((Cin * L, Cout * L), mxu_dtype)  # banded conv weight
    est += _padded_vmem_bytes((tb, Cout, L), f32)                  # LIF membrane scratch
    # in-kernel temporaries: cast x, conv output y, normalized yn, spike tile
    est += _padded_vmem_bytes((TT * tb, Cin * L), mxu_dtype)
    est += 2 * _padded_vmem_bytes((TT * tb, Cout, L), f32)
    est += _padded_vmem_bytes((TT * tb, Cout * L), f32)
    return est


def _pick_tiles(B, T, Cin, Cout, L, x_dtype, out_dtype, mxu_dtype,
                budget_bytes, max_time_block=8, prefer_two_batch_blocks=True):
    """Pick (tb, TT).

    tb is either B or a multiple of 8 dividing B (so the (sublane, lane) BlockSpec
    divisibility rule holds); when B % 16 == 0 we first try B//2 so the "parallel"
    batch axis has >= 2 blocks (megacore / v7x 2-TC sharding). TT divides T, is
    capped (the LIF loop is statically unrolled), and is maximized under the budget.
    """
    tb_cands = []
    if prefer_two_batch_blocks and B % 16 == 0:
        tb_cands.append(B // 2)
    tb_cands.append(B)
    t = (B // 2) // 8 * 8
    while t >= 8:
        if B % t == 0 and t not in tb_cands:
            tb_cands.append(t)
        t -= 8
    tt_cands = [d for d in range(min(T, max_time_block), 0, -1) if T % d == 0]
    for tb in tb_cands:
        for TT in tt_cands:
            if _vmem_estimate(tb, TT, Cin, Cout, L, x_dtype, out_dtype, mxu_dtype) <= budget_bytes:
                return tb, TT
    return tb_cands[-1], 1


# --------------------------------------------------------------------------- #
# Public entry point
# --------------------------------------------------------------------------- #
def conv_block_forward(x, w, *, tau=2.0, v_th=0.5,
                       mxu_dtype=jnp.float32, out_dtype=jnp.bfloat16,
                       approx_recip=True, max_time_block=8,
                       prefer_two_batch_blocks=True):
    """x: [T, B, C_in, L]; w: [C_out, C_in, 3] -> spikes [T, B, C_out, L] (out_dtype).

    mxu_dtype=jnp.bfloat16 selects the bf16-native MXU path (v5e/v6e/v7x); keep the
    default f32 (and set approx_recip=False) when the hard spike threshold must track
    an f32 reference as closely as possible.  Spikes are {0, 1}, exact in bfloat16.
    """
    T, B, Cin, L = x.shape
    Cout = w.shape[0]

    w_band = _band_weight(w.astype(jnp.float32), L, mxu_dtype)   # weight cast once, in wrapper
    x_flat = x.reshape(T, B, Cin * L)                            # free contiguous reshape

    capacity = _vmem_capacity_bytes()
    tb, TT = _pick_tiles(B, T, Cin, Cout, L, x.dtype, out_dtype, mxu_dtype,
                         budget_bytes=capacity // 4,
                         max_time_block=max_time_block,
                         prefer_two_batch_blocks=prefer_two_batch_blocks)
    est = _vmem_estimate(tb, TT, Cin, Cout, L, x.dtype, out_dtype, mxu_dtype)
    vmem_limit = int(max(32 << 20, min(3 * capacity // 4, 2 * est)))

    kernel = partial(conv_lif_kernel,
                     inv_tau=1.0 / float(tau), v_th=float(v_th),
                     TT=TT, tb=tb, Cin=Cin, Cout=Cout, L=L,
                     mxu_dtype=mxu_dtype, approx_recip=approx_recip)

    out_flat = pl.pallas_call(
        kernel,
        out_shape=jax.ShapeDtypeStruct((T, B, Cout * L), out_dtype),
        grid_spec=pltpu.PrefetchScalarGridSpec(
            num_scalar_prefetch=0,
            grid=(B // tb, T // TT),            # time innermost: LIF state carried in scratch
            in_specs=[
                pl.BlockSpec((TT, tb, Cin * L), lambda b, t: (t, b, 0)),
                pl.BlockSpec((Cin * L, Cout * L), lambda b, t: (0, 0)),
            ],
            out_specs=pl.BlockSpec((TT, tb, Cout * L), lambda b, t: (t, b, 0)),
            scratch_shapes=[pltpu.VMEM((tb, Cout, L), jnp.float32)],
        ),
        compiler_params=pltpu.CompilerParams(
            dimension_semantics=("parallel", "arbitrary"),
            vmem_limit_bytes=vmem_limit),
    )(x_flat, w_band)

    return out_flat.reshape(T, B, Cout, L)


# --------------------------------------------------------------------------- #
# Pure-JAX reference (mirrors the PyTorch forward in eval mode)
# --------------------------------------------------------------------------- #
def reference_forward(x, w, *, tau=2.0, v_th=0.5):
    """Returns (spikes, pre-spike membrane potentials) so the test can identify
    elements whose potential sits right at the hard threshold."""
    T, B, Cin, L = x.shape
    y = jax.lax.conv_general_dilated(
        x.reshape(T * B, Cin, L), w,
        window_strides=(1,), padding=((1, 1),),
        dimension_numbers=("NCH", "OIH", "NCH"),
        precision=jax.lax.Precision.HIGHEST,
    ).reshape(T, B, -1, L)
    y_min = y.min(axis=3, keepdims=True)
    y_max = y.max(axis=3, keepdims=True)
    y = (y - y_min) / (y_max - y_min + 1e-12)
    v = jnp.zeros_like(y[0])
    spikes, v_pres = [], []
    for t in range(T):
        v = v + (y[t] - v) / tau
        v_pres.append(v)
        s = (v >= v_th).astype(jnp.float32)
        v = v * (1.0 - s)
        spikes.append(s)
    return jnp.stack(spikes), jnp.stack(v_pres)


if __name__ == "__main__":
    # Small shapes implied by the module: T (time steps), B (batch), C_in, C_out, L.
    T, B, C_in, C_out, L = 4, 2, 4, 8, 16
    tau = 2.0

    key = jax.random.PRNGKey(0)
    kx, kw = jax.random.split(key)
    x = jax.random.normal(kx, (T, B, C_in, L), dtype=jnp.float32)
    # Deterministic Conv1d weight (bias=False), shape [C_out, C_in, kernel=3].
    fan_in = C_in * 3
    w = jax.random.uniform(
        kw, (C_out, C_in, 3), dtype=jnp.float32,
        minval=-1.0 / np.sqrt(fan_in), maxval=1.0 / np.sqrt(fan_in))

    out = conv_block_forward(x, w, tau=tau, v_th=0.5)
    out = jax.block_until_ready(out)

    ref, v_pre = reference_forward(x, w, tau=tau, v_th=0.5)
    out_np = np.asarray(out.astype(jnp.float32))
    ref_np = np.asarray(ref)
    v_np = np.asarray(v_pre)

    # Spikes are a hard threshold on a continuous membrane potential; tiny numerical
    # differences (matmul summation order, approx reciprocal) can legitimately flip
    # elements whose reference potential sits within `eps` of v_th=0.5, and such a
    # flip then cascades forward in time at that neuron (the reset changes v).
    # Excuse exactly those; every other element must match exactly.
    eps = 5e-3
    mismatch = out_np != ref_np
    borderline = np.abs(v_np - 0.5) < eps
    excusable = np.logical_or.accumulate(borderline, axis=0)
    unexplained = mismatch & ~excusable
    assert not unexplained.any(), (
        f"{int(unexplained.sum())} unexplained spike mismatches")
    assert mismatch.mean() <= 0.05, (
        f"spike mismatch rate {float(mismatch.mean()):.4f} too high")

    print("KERNEL_OK")
</pallas_src>

<mosaic_0001>
module attributes {stable_mosaic.version = 11 : i64} {
  func.func @conv_lif_kernel(%arg0: i32, %arg1: i32, %arg2: memref<4x2x64xf32, #tpu.memory_space<vmem>>, %arg3: memref<64x128xf32, #tpu.memory_space<vmem>>, %arg4: memref<4x2x128xbf16, #tpu.memory_space<vmem>>, %arg5: memref<2x8x16xf32, #tpu.memory_space<vmem>>) attributes {dimension_semantics = [#tpu.dimension_semantics<parallel>, #tpu.dimension_semantics<arbitrary>], iteration_bounds = array<i64: 1, 1>, scalar_prefetch = 0 : i64, scratch_operands = 1 : i64, tpu.core_type = #tpu.core_type<tc>, window_params = [{transform_indices = @transform_0, window_bounds = array<i64: 4, 2, 64>}, {pipeline_mode = #tpu.pipeline_mode<synchronous>, transform_indices = @transform_1, window_bounds = array<i64: 64, 128>}, {transform_indices = @transform_2, window_bounds = array<i64: 4, 2, 128>}]} {
    %c0_i32 = arith.constant 0 : i32
    %0 = arith.cmpi eq, %arg1, %c0_i32 : i32
    %1 = arith.extui %0 : i1 to i32
    %c0_i32_0 = arith.constant 0 : i32
    %2 = arith.cmpi ne, %1, %c0_i32_0 : i32
    scf.if %2 {
      %cst_35 = arith.constant 0.000000e+00 : f32
      %86 = vector.broadcast %cst_35 : f32 to vector<2x8x16xf32>
      %c0_36 = arith.constant 0 : index
      %c0_37 = arith.constant 0 : index
      %c0_38 = arith.constant 0 : index
      %87 = vector.load %arg5[%c0_36, %c0_37, %c0_38] : memref<2x8x16xf32, #tpu.memory_space<vmem>>, vector<2x8x16xf32>
      tpu.vector_store %arg5[%c0_36, %c0_37, %c0_38], %86 {strides = array<i32>} : memref<2x8x16xf32, #tpu.memory_space<vmem>>, vector<2x8x16xf32>,
    } else {
    }
    %c0 = arith.constant 0 : index
    %c0_1 = arith.constant 0 : index
    %c0_2 = arith.constant 0 : index
    %3 = vector.load %arg2[%c0, %c0_1, %c0_2] : memref<4x2x64xf32, #tpu.memory_space<vmem>>, vector<4x2x64xf32>
    %4 = vector.shape_cast %3 : vector<4x2x64xf32> to vector<8x64xf32>
    %c0_3 = arith.constant 0 : index
    %c0_4 = arith.constant 0 : index
    %5 = vector.load %arg3[%c0_3, %c0_4] : memref<64x128xf32, #tpu.memory_space<vmem>>, vector<64x128xf32>
    %cst = arith.constant dense<0.000000e+00> : vector<8x128xf32>
    %6 = tpu.matmul %4, %5, %cst {dimension_numbers = #tpu.dot_dimension_numbers<[1], [0], [0], [1], [0, 0, 1, 1], [], []>} : vector<8x64xf32>, vector<64x128xf32>, vector<8x128xf32> -> vector<8x128xf32>
    %7 = vector.shape_cast %6 : vector<8x128xf32> to vector<8x8x16xf32>
    %cst_5 = arith.constant dense<0x7F800000> : vector<8x8xf32>
    %8 = vector.multi_reduction <minimumf>, %7, %cst_5 [2] : vector<8x8x16xf32> to vector<8x8xf32>
    %9 = vector.shape_cast %8 : vector<8x8xf32> to vector<8x8x1xf32>
    %cst_6 = arith.constant dense<0xFF800000> : vector<8x8xf32>
    %10 = vector.multi_reduction <maximumf>, %7, %cst_6 [2] : vector<8x8x16xf32> to vector<8x8xf32>
    %11 = vector.shape_cast %10 : vector<8x8xf32> to vector<8x8x1xf32>
    %12 = arith.subf %11, %9 : vector<8x8x1xf32>
    %cst_7 = arith.constant 9.99999996E-13 : f32
    %13 = vector.broadcast %cst_7 : f32 to vector<8x8x1xf32>
    %14 = arith.addf %12, %13 : vector<8x8x1xf32>
    %15 = tpu.reciprocal %14 {approx = true} : vector<8x8x1xf32> -> vector<8x8x1xf32>
    %16 = vector.broadcast %9 : vector<8x8x1xf32> to vector<8x8x16xf32>
    %17 = arith.subf %7, %16 : vector<8x8x16xf32>
    %18 = vector.broadcast %15 : vector<8x8x1xf32> to vector<8x8x16xf32>
    %19 = arith.mulf %17, %18 : vector<8x8x16xf32>
    %c0_8 = arith.constant 0 : index
    %c0_9 = arith.constant 0 : index
    %c0_10 = arith.constant 0 : index
    %20 = vector.load %arg5[%c0_8, %c0_9, %c0_10] : memref<2x8x16xf32, #tpu.memory_space<vmem>>, vector<2x8x16xf32>
    %21 = vector.extract_strided_slice %19 {offsets = [0, 0, 0], sizes = [2, 8, 16], strides = [1, 1, 1]} : vector<8x8x16xf32> to vector<2x8x16xf32>
    %22 = arith.subf %21, %20 : vector<2x8x16xf32>
    %cst_11 = arith.constant 5.000000e-01 : f32
    %23 = vector.broadcast %cst_11 : f32 to vector<2x8x16xf32>
    %24 = arith.mulf %22, %23 : vector<2x8x16xf32>
    %25 = arith.addf %20, %24 : vector<2x8x16xf32>
    %cst_12 = arith.constant 5.000000e-01 : f32
    %26 = vector.broadcast %cst_12 : f32 to vector<2x8x16xf32>
    %27 = arith.cmpf oge, %25, %26 : vector<2x8x16xf32>
    %28 = arith.extui %27 : vector<2x8x16xi1> to vector<2x8x16xi32>
    %29 = arith.sitofp %28 : vector<2x8x16xi32> to vector<2x8x16xf32>
    %30 = arith.truncf %29 : vector<2x8x16xf32> to vector<2x8x16xbf16>
    %31 = vector.shape_cast %30 : vector<2x8x16xbf16> to vector<2x128xbf16>
    %c0_13 = arith.constant 0 : index
    %c0_14 = arith.constant 0 : index
    %c0_15 = arith.constant 0 : index
    %32 = vector.load %arg4[%c0_13, %c0_14, %c0_15] : memref<4x2x128xbf16, #tpu.memory_space<vmem>>, vector<1x2x128xbf16>
    %33 = vector.shape_cast %32 : vector<1x2x128xbf16> to vector<2x128xbf16>
    %34 = vector.shape_cast %31 : vector<2x128xbf16> to vector<1x2x128xbf16>
    tpu.vector_store %arg4[%c0_13, %c0_14, %c0_15], %34 {strides = array<i32>} : memref<4x2x128xbf16, #tpu.memory_space<vmem>>, vector<1x2x128xbf16>,
    %cst_16 = arith.constant 0.000000e+00 : f32
    %35 = vector.broadcast %cst_16 : f32 to vector<2x8x16xf32>
    %36 = arith.select %27, %35, %25 : vector<2x8x16xi1>, vector<2x8x16xf32>
    %37 = vector.extract_strided_slice %19 {offsets = [2, 0, 0], sizes = [2, 8, 16], strides = [1, 1, 1]} : vector<8x8x16xf32> to vector<2x8x16xf32>
    %38 = arith.subf %37, %36 : vector<2x8x16xf32>
    %cst_17 = arith.constant 5.000000e-01 : f32
    %39 = vector.broadcast %cst_17 : f32 to vector<2x8x16xf32>
    %40 = arith.mulf %38, %39 : vector<2x8x16xf32>
    %41 = arith.addf %36, %40 : vector<2x8x16xf32>
    %cst_18 = arith.constant 5.000000e-01 : f32
    %42 = vector.broadcast %cst_18 : f32 to vector<2x8x16xf32>
    %43 = arith.cmpf oge, %41, %42 : vector<2x8x16xf32>
    %44 = arith.extui %43 : vector<2x8x16xi1> to vector<2x8x16xi32>
    %45 = arith.sitofp %44 : vector<2x8x16xi32> to vector<2x8x16xf32>
    %46 = arith.truncf %45 : vector<2x8x16xf32> to vector<2x8x16xbf16>
    %47 = vector.shape_cast %46 : vector<2x8x16xbf16> to vector<2x128xbf16>
    %c1 = arith.constant 1 : index
    %c0_19 = arith.constant 0 : index
    %c0_20 = arith.constant 0 : index
    %48 = vector.load %arg4[%c1, %c0_19, %c0_20] : memref<4x2x128xbf16, #tpu.memory_space<vmem>>, vector<1x2x128xbf16>
    %49 = vector.shape_cast %48 : vector<1x2x128xbf16> to vector<2x128xbf16>
    %50 = vector.shape_cast %47 : vector<2x128xbf16> to vector<1x2x128xbf16>
    tpu.vector_store %arg4[%c1, %c0_19, %c0_20], %50 {strides = array<i32>} : memref<4x2x128xbf16, #tpu.memory_space<vmem>>, vector<1x2x128xbf16>,
    %cst_21 = arith.constant 0.000000e+00 : f32
    %51 = vector.broadcast %cst_21 : f32 to vector<2x8x16xf32>
    %52 = arith.select %43, %51, %41 : vector<2x8x16xi1>, vector<2x8x16xf32>
    %53 = vector.extract_strided_slice %19 {offsets = [4, 0, 0], sizes = [2, 8, 16], strides = [1, 1, 1]} : vector<8x8x16xf32> to vector<2x8x16xf32>
    %54 = arith.subf %53, %52 : vector<2x8x16xf32>
    %cst_22 = arith.constant 5.000000e-01 : f32
    %55 = vector.broadcast %cst_22 : f32 to vector<2x8x16xf32>
    %56 = arith.mulf %54, %55 : vector<2x8x16xf32>
    %57 = arith.addf %52, %56 : vector<2x8x16xf32>
    %cst_23 = arith.constant 5.000000e-01 : f32
    %58 = vector.broadcast %cst_23 : f32 to vector<2x8x16xf32>
    %59 = arith.cmpf oge, %57, %58 : vector<2x8x16xf32>
    %60 = arith.extui %59 : vector<2x8x16xi1> to vector<2x8x16xi32>
    %61 = arith.sitofp %60 : vector<2x8x16xi32> to vector<2x8x16xf32>
    %62 = arith.truncf %61 : vector<2x8x16xf32> to vector<2x8x16xbf16>
    %63 = vector.shape_cast %62 : vector<2x8x16xbf16> to vector<2x128xbf16>
    %c2 = arith.constant 2 : index
    %c0_24 = arith.constant 0 : index
    %c0_25 = arith.constant 0 : index
    %64 = vector.load %arg4[%c2, %c0_24, %c0_25] : memref<4x2x128xbf16, #tpu.memory_space<vmem>>, vector<1x2x128xbf16>
    %65 = vector.shape_cast %64 : vector<1x2x128xbf16> to vector<2x128xbf16>
    %66 = vector.shape_cast %63 : vector<2x128xbf16> to vector<1x2x128xbf16>
    tpu.vector_store %arg4[%c2, %c0_24, %c0_25], %66 {strides = array<i32>} : memref<4x2x128xbf16, #tpu.memory_space<vmem>>, vector<1x2x128xbf16>,
    %cst_26 = arith.constant 0.000000e+00 : f32
    %67 = vector.broadcast %cst_26 : f32 to vector<2x8x16xf32>
    %68 = arith.select %59, %67, %57 : vector<2x8x16xi1>, vector<2x8x16xf32>
    %69 = vector.extract_strided_slice %19 {offsets = [6, 0, 0], sizes = [2, 8, 16], strides = [1, 1, 1]} : vector<8x8x16xf32> to vector<2x8x16xf32>
    %70 = arith.subf %69, %68 : vector<2x8x16xf32>
    %cst_27 = arith.constant 5.000000e-01 : f32
    %71 = vector.broadcast %cst_27 : f32 to vector<2x8x16xf32>
    %72 = arith.mulf %70, %71 : vector<2x8x16xf32>
    %73 = arith.addf %68, %72 : vector<2x8x16xf32>
    %cst_28 = arith.constant 5.000000e-01 : f32
    %74 = vector.broadcast %cst_28 : f32 to vector<2x8x16xf32>
    %75 = arith.cmpf oge, %73, %74 : vector<2x8x16xf32>
    %76 = arith.extui %75 : vector<2x8x16xi1> to vector<2x8x16xi32>
    %77 = arith.sitofp %76 : vector<2x8x16xi32> to vector<2x8x16xf32>
    %78 = arith.truncf %77 : vector<2x8x16xf32> to vector<2x8x16xbf16>
    %79 = vector.shape_cast %78 : vector<2x8x16xbf16> to vector<2x128xbf16>
    %c3 = arith.constant 3 : index
    %c0_29 = arith.constant 0 : index
    %c0_30 = arith.constant 0 : index
    %80 = vector.load %arg4[%c3, %c0_29, %c0_30] : memref<4x2x128xbf16, #tpu.memory_space<vmem>>, vector<1x2x128xbf16>
    %81 = vector.shape_cast %80 : vector<1x2x128xbf16> to vector<2x128xbf16>
    %82 = vector.shape_cast %79 : vector<2x128xbf16> to vector<1x2x128xbf16>
    tpu.vector_store %arg4[%c3, %c0_29, %c0_30], %82 {strides = array<i32>} : memref<4x2x128xbf16, #tpu.memory_space<vmem>>, vector<1x2x128xbf16>,
    %cst_31 = arith.constant 0.000000e+00 : f32
    %83 = vector.broadcast %cst_31 : f32 to vector<2x8x16xf32>
    %84 = arith.select %75, %83, %73 : vector<2x8x16xi1>, vector<2x8x16xf32>
    %c0_32 = arith.constant 0 : index
    %c0_33 = arith.constant 0 : index
    %c0_34 = arith.constant 0 : index
    %85 = vector.load %arg5[%c0_32, %c0_33, %c0_34] : memref<2x8x16xf32, #tpu.memory_space<vmem>>, vector<2x8x16xf32>
    tpu.vector_store %arg5[%c0_32, %c0_33, %c0_34], %84 {strides = array<i32>} : memref<2x8x16xf32, #tpu.memory_space<vmem>>, vector<2x8x16xf32>,
    return
  }
  func.func @transform_0(%arg0: i32, %arg1: i32) -> (i32, i32, i32) {
    %c0_i32 = arith.constant 0 : i32
    %c0_i32_0 = arith.constant 0 : i32
    return %arg1, %arg0, %c0_i32 : i32, i32, i32
  }
  func.func @transform_1(%arg0: i32, %arg1: i32) -> (i32, i32) {
    %c0_i32 = arith.constant 0 : i32
    %c0_i32_0 = arith.constant 0 : i32
    %c0_i32_1 = arith.constant 0 : i32
    return %c0_i32, %c0_i32_0 : i32, i32
  }
  func.func @transform_2(%arg0: i32, %arg1: i32) -> (i32, i32, i32) {
    %c0_i32 = arith.constant 0 : i32
    %c0_i32_0 = arith.constant 0 : i32
    return %arg1, %arg0, %c0_i32 : i32, i32, i32
  }
}

</mosaic_0001>

<llo_original>
// kernel: tpu_custom_call.1
$region0: #{tpu_custom_call.1}
  #allocation0 [shape = 'u32[]', space=smem, size = 0x4, offset = 0x4, fixed_abs, tag = 'smem constant byte address 0x4 - core index']
  #allocation1 [shape = 'u32[144,128]{1,0:T(1,128)}', space=vmem, size = 0x12000, scoped, tag = 'internal scratch']
  #allocation2 [shape = 'f32[2,8,16]{2,1,0:T(8,128)}', space=vmem, size = 0x2000, scoped, tag = 'scratch operand']
  %s0 = inlined_call_operand.hbm [shape: f32[4,2,64], index: 0, kind: input, shape index: {}]
  %s1 = inlined_call_operand.hbm [shape: f32[64,128], index: 1, kind: input, shape index: {}]
  %s2 = inlined_call_operand.hbm [shape: bf16[4,2,128], index: 2, kind: output, shape index: {}]
  %s3 = sld [smem:[#allocation0]]
  $region30: #{tpu_custom_call.1} parent=0
    _
  %s5 = ssub.s32 1, %s3
  %s6 = scalar_select 0, %s5, %s3
  $region1: #{tpu_custom_call.1} parent=0
    #allocation3 [shape = 'u8[4096]{0}', space=vmem, size = 0x1000, scoped, tag = 'input window, operand 0, single buffered']
    #allocation4 [shape = 's32[1]{0}', space=sflag, size = 0x4, scoped, tag = 'scoped memory for tpu_custom_call.1']
    #allocation5 [shape = 's32[1]{0}', space=sflag, size = 0x4, scoped, tag = 'scoped memory for tpu_custom_call.1']
    #allocation6 [shape = 'u8[32768]{0}', space=vmem, size = 0x8000, scoped, tag = 'input window, operand 1, single buffered']
    #allocation7 [shape = 's32[1]{0}', space=sflag, size = 0x4, scoped, tag = 'scoped memory for tpu_custom_call.1']
    #allocation8 [shape = 'u8[2048]{0}', space=vmem, size = 0x800, scoped, tag = 'output window, operand 0, single buffered']
    %7 = vsyncpa [#allocation4], 0
    %8 = vsyncpa [#allocation7], 0
    %9 = vsyncpa [#allocation5], 0
    // Predicated region
    $region2: #{tpu_custom_call.1} parent=1 // pred_check
      _
    $region3: #{tpu_custom_call.1} parent=1 // pred_check_branch
      %11 = sbr.rel (0) target = $region5
    $region4: #{tpu_custom_call.1} parent=1 // pred_region
      %s13 = ssub.s32 128, 128
      %14 = vsyncadd [#allocation4], %s13
      %s15 = sshll.u32 [#allocation3], 4
      %s16 = int_to_ptr.vmem [resolvable:$true] %s15
      %21 = dma.hbm_to_vmem [thread:$0]  %s0, 128, %s16, [#allocation4], 32, 32, 2
    $region5: #{tpu_custom_call.1} parent=1 // pred_fallthru
      _
    // Predicated region
    $region6: #{tpu_custom_call.1} parent=1 // pred_check
      _
    $region7: #{tpu_custom_call.1} parent=1 // pred_check_branch
      %23 = sbr.rel (0) target = $region9
    $region8: #{tpu_custom_call.1} parent=1 // pred_region
      %s25 = ssub.s32 1024, 1024
      %26 = vsyncadd [#allocation7], %s25
      %s27 = sshll.u32 [#allocation6], 4
      %s28 = int_to_ptr.vmem [resolvable:$true] %s27
      %33 = dma.hbm_to_vmem [thread:$0]  %s1, 1024, %s28, [#allocation7], 128, 128, 8
    $region9: #{tpu_custom_call.1} parent=1 // pred_fallthru
      _
    // Predicated region
    $region10: #{tpu_custom_call.1} parent=1 // pred_check
      _
    $region11: #{tpu_custom_call.1} parent=1 // pred_check_branch
      %35 = sbr.rel (0) target = $region13
    $region12: #{tpu_custom_call.1} parent=1 // pred_region
      %36 = dma.done [#allocation4], 128
    $region13: #{tpu_custom_call.1} parent=1 // pred_fallthru
      _
    // Predicated region
    $region14: #{tpu_custom_call.1} parent=1 // pred_check
      _
    $region15: #{tpu_custom_call.1} parent=1 // pred_check_branch
      %38 = sbr.rel (0) target = $region17
    $region16: #{tpu_custom_call.1} parent=1 // pred_region
      %39 = dma.done [#allocation7], 1024
    $region17: #{tpu_custom_call.1} parent=1 // pred_fallthru
      _
    %p41 = scmp.eq.s32.totalorder 0, 0
    // Predicated region
    $region18: #{tpu_custom_call.1} parent=1 // pred_check
      %p42 = pneg %p41
    $region19: #{tpu_custom_call.1} parent=1 // pred_check_branch
      %44 = sbr.rel (%p42) target = $region21
    $region20: #{tpu_custom_call.1} parent=1 // pred_region
      %vm45 = vcmask 130048
      %46 = vst.msk [vmem:[#allocation2] sm:$0xff] %vm45, 0.0
      %47 = vst.msk [vmem:[#allocation2 + $0x8] sm:$0xff] %vm45, 0.0
    $region21: #{tpu_custom_call.1} parent=1 // pred_fallthru
      _
    %v48 = vld [vmem:[#allocation3] sm:$0x3]
    %v49 = vld [vmem:[#allocation3 + $0x2] sm:$0x3]
    %v50 = vld [vmem:[#allocation3 + $0x4] sm:$0x3]
    %v51 = vld [vmem:[#allocation3 + $0x6] sm:$0x3]
    %v52 = vld [vmem:[#allocation6] sm:$0xff]
    %v53 = vld [vmem:[#allocation6 + $0x8] sm:$0xff]
    %v54 = vld [vmem:[#allocation6 + $0x10] sm:$0xff]
    %v55 = vld [vmem:[#allocation6 + $0x18] sm:$0xff]
    %v56 = vld [vmem:[#allocation6 + $0x20] sm:$0xff]
    %v57 = vld [vmem:[#allocation6 + $0x28] sm:$0xff]
    %v58 = vld [vmem:[#allocation6 + $0x30] sm:$0xff]
    %v59 = vld [vmem:[#allocation6 + $0x38] sm:$0xff]
    %v64 = vcombine.low %v48, %v49
    %v65 = vcombine.low %v50, %v51
    %v67 = vunpack.c.l.s4 1983009808
    %v68 = vunpack.c.0.s8 %v67
    %v69 = vlaneseq
    %v70 = vshrl.u32 %v69, 7
    %v71 = vsub.s32 %v68, %v70
    %v72 = vrot.slane %v64, %v71
    %v74 = vunpack.c.l.s4 1983009808
    %v75 = vunpack.c.0.s8 %v74
    %v76 = vlaneseq
    %v77 = vshrl.u32 %v76, 7
    %v78 = vsub.s32 %v75, %v77
    %v79 = vrot.slane %v65, %v78
    %v80 = vcombine.low %v72, %v79
    %vm81 = vcmask 523264
    %v82 = vsel %vm81, %v80, 0
    %84 = vmatprep.subr.mxu0 0.0
    %85 = vmatpush1.msra.mxu0 %v52
    %86 = vmatprep.subr.mxu0 0.0
    %87 = vmatpush1.msra.mxu0 %v53
    %88 = vmatprep.subr.mxu0 0.0
    %89 = vmatpush1.msra.mxu0 %v54
    %90 = vmatprep.subr.mxu0 0.0
    %91 = vmatpush1.msra.mxu0 %v55
    %92 = vmatprep.subr.mxu0 0.0
    %93 = vmatpush1.msra.mxu0 %v56
    %94 = vmatprep.subr.mxu0 0.0
    %95 = vmatpush1.msra.mxu0 %v57
    %96 = vmatprep.subr.mxu0 0.0
    %97 = vmatpush1.msra.mxu0 %v58
    %98 = vmatprep.subr.mxu0 0.0
    %99 = vmatpush1.msra.mxu0 %v59
    %100 = vmatprep.subr.mxu0 0.0
    %101 = vmatpush1.msra.mxu0 0.0
    %102 = vmatprep.subr.mxu0 0.0
    %103 = vmatpush1.msra.mxu0 0.0
    %104 = vmatprep.subr.mxu0 0.0
    %105 = vmatpush1.msra.mxu0 0.0
    %106 = vmatprep.subr.mxu0 0.0
    %107 = vmatpush1.msra.mxu0 0.0
    %108 = vmatprep.subr.mxu0 0.0
    %109 = vmatpush1.msra.mxu0 0.0
    %110 = vmatprep.subr.mxu0 0.0
    %111 = vmatpush1.msra.mxu0 0.0
    %112 = vmatprep.subr.mxu0 0.0
    %113 = vmatpush1.msra.mxu0 0.0
    %114 = vmatprep.subr.mxu0 0.0
    %115 = vmatpush1.msra.mxu0 0.0
    %116 = vmatprep.subr.mxu0 0.0
    %117 = vmatpush1.msra.mxu0 0.0
    %118 = vmatprep.subr.mxu0 0.0
    %119 = vmatpush1.msra.mxu0 0.0
    %120 = vmatprep.subr.mxu0 0.0
    %121 = vmatpush1.msra.mxu0 0.0
    %122 = vmatprep.subr.mxu0 0.0
    %123 = vmatpush1.msra.mxu0 0.0
    %124 = vmatprep.subr.mxu0 0.0
    %125 = vmatpush1.msra.mxu0 0.0
    %126 = vmatprep.subr.mxu0 0.0
    %127 = vmatpush1.msra.mxu0 0.0
    %128 = vmatprep.subr.mxu0 0.0
    %129 = vmatpush1.msra.mxu0 0.0
    %130 = vmatprep.subr.mxu0 0.0
    %131 = vmatpush1.msra.mxu0 0.0
    %132 = vmatprep.subr.mxu0 0.0
    %133 = vmatpush1.msra.mxu0 0.0
    %134 = vmatprep.subr.mxu0 0.0
    %135 = vmatpush1.msra.mxu0 0.0
    %136 = vmatprep.subr.mxu0 0.0
    %137 = vmatpush1.msra.mxu0 0.0
    %138 = vmatprep.subr.mxu0 0.0
    %139 = vmatpush1.msra.mxu0 0.0
    %140 = vmatprep.subr.mxu0 0.0
    %141 = vmatpush1.msra.mxu0 0.0
    %142 = vmatprep.subr.mxu0 0.0
    %143 = vmatpush1.msra.mxu0 0.0
    %144 = vmatprep.subr.mxu0 0.0
    %145 = vmatpush1.msra.mxu0 0.0
    %146 = vmatprep.subr.mxu0 0.0
    %147 = vmatpush1.msra.mxu0 0.0
    %148 = vmatprep.mubr.f32.mxu0 0.0
    %149 = vmatmul.mubr.f32.gmra.mrb[0].mxu0 %v82
    %v150 = vpop.f32.mrb[0].mxu0
    %v151 = vadd.f32 0.0, %v150
    %v152 = vpop.f32.mrb[0].mxu0
    %153 = vdwg.mxu0
    %155 = vrot.lane.b32.xlu0 %v151, 112
    %v156 = vpop.permute.xlu0 %155
    %158 = vrot.lane.b32.xlu0 %v151, 96
    %v159 = vpop.permute.xlu0 %158
    %161 = vrot.lane.b32.xlu0 %v151, 80
    %v162 = vpop.permute.xlu0 %161
    %164 = vrot.lane.b32.xlu0 %v151, 64
    %v165 = vpop.permute.xlu0 %164
    %167 = vrot.lane.b32.xlu0 %v151, 48
    %v168 = vpop.permute.xlu0 %167
    %170 = vrot.lane.b32.xlu0 %v151, 32
    %v171 = vpop.permute.xlu0 %170
    %173 = vrot.lane.b32.xlu0 %v151, 16
    %v174 = vpop.permute.xlu0 %173
    %v176 = vcombine.low %v151, %v159
    %v177 = vcombine.high %v151, %v159
    %v179 = vunpack.c.l.s4 1983009808
    %v180 = vunpack.c.0.s8 %v179
    %v181 = vlaneseq
    %v182 = vshrl.u32 %v181, 7
    %v183 = vsub.s32 %v180, %v182
    %v184 = vrot.slane %v176, %v183
    %v186 = vunpack.c.l.s4 1983009808
    %v187 = vunpack.c.0.s8 %v186
    %v188 = vlaneseq
    %v189 = vshrl.u32 %v188, 7
    %v190 = vsub.s32 %v187, %v189
    %v191 = vrot.slane %v177, %v190
    %v192 = vcombine.low %v156, %v162
    %v193 = vcombine.high %v156, %v162
    %v195 = vunpack.c.l.s4 1983009808
    %v196 = vunpack.c.0.s8 %v195
    %v197 = vlaneseq
    %v198 = vshrl.u32 %v197, 7
    %v199 = vsub.s32 %v196, %v198
    %v200 = vrot.slane %v192, %v199
    %v202 = vunpack.c.l.s4 1983009808
    %v203 = vunpack.c.0.s8 %v202
    %v204 = vlaneseq
    %v205 = vshrl.u32 %v204, 7
    %v206 = vsub.s32 %v203, %v205
    %v207 = vrot.slane %v193, %v206
    %v208 = vcombine.low %v165, %v171
    %v209 = vcombine.high %v165, %v171
    %v211 = vunpack.c.l.s4 1983009808
    %v212 = vunpack.c.0.s8 %v211
    %v213 = vlaneseq
    %v214 = vshrl.u32 %v213, 7
    %v215 = vsub.s32 %v212, %v214
    %v216 = vrot.slane %v208, %v215
    %v218 = vunpack.c.l.s4 1983009808
    %v219 = vunpack.c.0.s8 %v218
    %v220 = vlaneseq
    %v221 = vshrl.u32 %v220, 7
    %v222 = vsub.s32 %v219, %v221
    %v223 = vrot.slane %v209, %v222
    %v224 = vcombine.low %v168, %v174
    %v225 = vcombine.high %v168, %v174
    %v227 = vunpack.c.l.s4 1983009808
    %v228 = vunpack.c.0.s8 %v227
    %v229 = vlaneseq
    %v230 = vshrl.u32 %v229, 7
    %v231 = vsub.s32 %v228, %v230
    %v232 = vrot.slane %v224, %v231
    %v234 = vunpack.c.l.s4 1983009808
    %v235 = vunpack.c.0.s8 %v234
    %v236 = vlaneseq
    %v237 = vshrl.u32 %v236, 7
    %v238 = vsub.s32 %v235, %v237
    %v239 = vrot.slane %v225, %v238
    %v240 = vcombine.low %v184, %v200
    %v241 = vcombine.high %v184, %v200
    %v243 = vunpack.c.l.s4 1934713408
    %v244 = vunpack.c.0.s8 %v243
    %v245 = vlaneseq
    %v246 = vshrl.u32 %v245, 7
    %v247 = vsub.s32 %v244, %v246
    %v248 = vrot.slane %v240, %v247
    %v250 = vunpack.c.l.s4 1934713408
    %v251 = vunpack.c.0.s8 %v250
    %v252 = vlaneseq
    %v253 = vshrl.u32 %v252, 7
    %v254 = vsub.s32 %v251, %v253
    %v255 = vrot.slane %v241, %v254
    %v256 = vcombine.low %v191, %v207
    %v257 = vcombine.high %v191, %v207
    %v259 = vunpack.c.l.s4 1934713408
    %v260 = vunpack.c.0.s8 %v259
    %v261 = vlaneseq
    %v262 = vshrl.u32 %v261, 7
    %v263 = vsub.s32 %v260, %v262
    %v264 = vrot.slane %v256, %v263
    %v266 = vunpack.c.l.s4 1934713408
    %v267 = vunpack.c.0.s8 %v266
    %v268 = vlaneseq
    %v269 = vshrl.u32 %v268, 7
    %v270 = vsub.s32 %v267, %v269
    %v271 = vrot.slane %v257, %v270
    %v272 = vcombine.low %v216, %v232
    %v273 = vcombine.high %v216, %v232
    %v275 = vunpack.c.l.s4 1934713408
    %v276 = vunpack.c.0.s8 %v275
    %v277 = vlaneseq
    %v278 = vshrl.u32 %v277, 7
    %v279 = vsub.s32 %v276, %v278
    %v280 = vrot.slane %v272, %v279
    %v282 = vunpack.c.l.s4 1934713408
    %v283 = vunpack.c.0.s8 %v282
    %v284 = vlaneseq
    %v285 = vshrl.u32 %v284, 7
    %v286 = vsub.s32 %v283, %v285
    %v287 = vrot.slane %v273, %v286
    %v288 = vcombine.low %v223, %v239
    %v289 = vcombine.high %v223, %v239
    %v291 = vunpack.c.l.s4 1934713408
    %v292 = vunpack.c.0.s8 %v291
    %v293 = vlaneseq
    %v294 = vshrl.u32 %v293, 7
    %v295 = vsub.s32 %v292, %v294
    %v296 = vrot.slane %v288, %v295
    %v298 = vunpack.c.l.s4 1934713408
    %v299 = vunpack.c.0.s8 %v298
    %v300 = vlaneseq
    %v301 = vshrl.u32 %v300, 7
    %v302 = vsub.s32 %v299, %v301
    %v303 = vrot.slane %v289, %v302
    %v304 = vcombine.low %v248, %v280
    %v305 = vcombine.high %v248, %v280
    %v306 = vcombine.low %v255, %v287
    %v307 = vcombine.high %v255, %v287
    %v308 = vcombine.low %v264, %v296
    %v309 = vcombine.high %v264, %v296
    %v310 = vcombine.low %v271, %v303
    %v311 = vcombine.high %v271, %v303
    %vm312 = vcmask 130048
    %v313 = vsel %vm312, %v304, inf
    %314 = vmin.xlane.f32.xlu0 %v313
    %v315 = vpop.xlane.xlu0 %314
    %v316 = vsel %vm312, %v305, inf
    %317 = vmin.xlane.f32.xlu0 %v316
    %v318 = vpop.xlane.xlu0 %317
    %v319 = vsel %vm312, %v306, inf
    %320 = vmin.xlane.f32.xlu0 %v319
    %v321 = vpop.xlane.xlu0 %320
    %v322 = vsel %vm312, %v307, inf
    %323 = vmin.xlane.f32.xlu0 %v322
    %v324 = vpop.xlane.xlu0 %323
    %v325 = vsel %vm312, %v308, inf
    %326 = vmin.xlane.f32.xlu0 %v325
    %v327 = vpop.xlane.xlu0 %326
    %v328 = vsel %vm312, %v309, inf
    %329 = vmin.xlane.f32.xlu0 %v328
    %v330 = vpop.xlane.xlu0 %329
    %v331 = vsel %vm312, %v310, inf
    %332 = vmin.xlane.f32.xlu0 %v331
    %v333 = vpop.xlane.xlu0 %332
    %v334 = vsel %vm312, %v311, inf
    %335 = vmin.xlane.f32.xlu0 %v334
    %v336 = vpop.xlane.xlu0 %335
    %v337 = vsel %vm312, %v304, -inf
    %338 = vmax.xlane.f32.xlu0 %v337
    %v339 = vpop.xlane.xlu0 %338
    %v340 = vsel %vm312, %v305, -inf
    %341 = vmax.xlane.f32.xlu0 %v340
    %v342 = vpop.xlane.xlu0 %341
    %v343 = vsel %vm312, %v306, -inf
    %344 = vmax.xlane.f32.xlu0 %v343
    %v345 = vpop.xlane.xlu0 %344
    %v346 = vsel %vm312, %v307, -inf
    %347 = vmax.xlane.f32.xlu0 %v346
    %v348 = vpop.xlane.xlu0 %347
    %v349 = vsel %vm312, %v308, -inf
    %350 = vmax.xlane.f32.xlu0 %v349
    %v351 = vpop.xlane.xlu0 %350
    %v352 = vsel %vm312, %v309, -inf
    %353 = vmax.xlane.f32.xlu0 %v352
    %v354 = vpop.xlane.xlu0 %353
    %v355 = vsel %vm312, %v310, -inf
    %356 = vmax.xlane.f32.xlu0 %v355
    %v357 = vpop.xlane.xlu0 %356
    %v358 = vsel %vm312, %v311, -inf
    %359 = vmax.xlane.f32.xlu0 %v358
    %v360 = vpop.xlane.xlu0 %359
    %v361 = vsub.f32 %v339, %v315
    %v362 = vsub.f32 %v342, %v318
    %v363 = vsub.f32 %v345, %v321
    %v364 = vsub.f32 %v348, %v324
    %v365 = vsub.f32 %v351, %v327
    %v366 = vsub.f32 %v354, %v330
    %v367 = vsub.f32 %v357, %v333
    %v368 = vsub.f32 %v360, %v336
    %v369 = vadd.f32 %v361, 1e-12
    %v370 = vadd.f32 %v362, 1e-12
    %v371 = vadd.f32 %v363, 1e-12
    %v372 = vadd.f32 %v364, 1e-12
    %v373 = vadd.f32 %v365, 1e-12
    %v374 = vadd.f32 %v366, 1e-12
    %v375 = vadd.f32 %v367, 1e-12
    %v376 = vadd.f32 %v368, 1e-12
    %v377 = vrcp.pop %v369
    %v378 = vrcp.pop %v370
    %v379 = vrcp.pop %v371
    %v380 = vrcp.pop %v372
    %v381 = vrcp.pop %v373
    %v382 = vrcp.pop %v374
    %v383 = vrcp.pop %v375
    %v384 = vrcp.pop %v376
    %v385 = vsub.f32 %v304, %v315
    %v386 = vsub.f32 %v305, %v318
    %v387 = vsub.f32 %v306, %v321
    %v388 = vsub.f32 %v307, %v324
    %v389 = vsub.f32 %v308, %v327
    %v390 = vsub.f32 %v309, %v330
    %v391 = vsub.f32 %v310, %v333
    %v392 = vsub.f32 %v311, %v336
    %v393 = vmul.f32 %v385, %v377
    %v394 = vmul.f32 %v386, %v378
    %v395 = vmul.f32 %v387, %v379
    %v396 = vmul.f32 %v388, %v380
    %v397 = vmul.f32 %v389, %v381
    %v398 = vmul.f32 %v390, %v382
    %v399 = vmul.f32 %v391, %v383
    %v400 = vmul.f32 %v392, %v384
    %v401 = vld [vmem:[#allocation2] sm:$0xff]
    %v402 = vld [vmem:[#allocation2 + $0x8] sm:$0xff]
    %v403 = vsub.f32 %v393, %v401
    %v404 = vsub.f32 %v394, %v402
    %v405 = vmul.f32 %v403, 0.5
    %v406 = vmul.f32 %v404, 0.5
    %v407 = vadd.f32 %v401, %v405
    %v408 = vadd.f32 %v402, %v406
    %vm409 = vcmp.ge.f32.partialorder %v407, 0.5
    %vm410 = vcmp.ge.f32.partialorder %v408, 0.5
    %v411 = vsel %vm409, 1, 0
    %v412 = vsel %vm410, 1, 0
    %v413 = vcvt.s32.f32 %v411
    %v414 = vcvt.s32.f32 %v412
    %v415 = vpack.c.bf16 %v413, %v413
    %v417 = vunpack.c.l.s4 1983009808
    %v418 = vunpack.c.0.s8 %v417
    %v419 = vlaneseq
    %v420 = vshrl.u32 %v419, 7
    %v421 = vsub.s32 %v418, %v420
    %v422 = vrot.slane %v415, %v421
    %v423 = vcombine.high %v422, 0
    %v425 = vunpack.c.l.s4 1934713408
    %v426 = vunpack.c.0.s8 %v425
    %v427 = vlaneseq
    %v428 = vshrl.u32 %v427, 7
    %v429 = vsub.s32 %v426, %v428
    %v430 = vrot.slane %v422, %v429
    %v432 = vunpack.c.l.s4 1934713408
    %v433 = vunpack.c.0.s8 %v432
    %v434 = vlaneseq
    %v435 = vshrl.u32 %v434, 7
    %v436 = vsub.s32 %v433, %v435
    %v437 = vrot.slane %v423, %v436
    %v438 = vcombine.high %v430, 0
    %v439 = vcombine.high %v437, 0
    %v440 = vpack.c.bf16 %v414, %v414
    %v442 = vunpack.c.l.s4 1983009808
    %v443 = vunpack.c.0.s8 %v442
    %v444 = vlaneseq
    %v445 = vshrl.u32 %v444, 7
    %v446 = vsub.s32 %v443, %v445
    %v447 = vrot.slane %v440, %v446
    %v448 = vcombine.high %v447, 0
    %v450 = vunpack.c.l.s4 1934713408
    %v451 = vunpack.c.0.s8 %v450
    %v452 = vlaneseq
    %v453 = vshrl.u32 %v452, 7
    %v454 = vsub.s32 %v451, %v453
    %v455 = vrot.slane %v447, %v454
    %v457 = vunpack.c.l.s4 1934713408
    %v458 = vunpack.c.0.s8 %v457
    %v459 = vlaneseq
    %v460 = vshrl.u32 %v459, 7
    %v461 = vsub.s32 %v458, %v460
    %v462 = vrot.slane %v448, %v461
    %v463 = vcombine.high %v455, 0
    %v464 = vcombine.high %v462, 0
    %v467 = vpack.i.b16 %v455, %v430
    %v468 = vshrl.u32 %v430, 16
    %v469 = vshrl.u32 %v455, 16
    %v470 = vpack.i.b16 %v469, %v468
    %v473 = vpack.i.b16 %v463, %v438
    %v474 = vshrl.u32 %v438, 16
    %v475 = vshrl.u32 %v463, 16
    %v476 = vpack.i.b16 %v475, %v474
    %v479 = vpack.i.b16 %v462, %v437
    %v480 = vshrl.u32 %v437, 16
    %v481 = vshrl.u32 %v462, 16
    %v482 = vpack.i.b16 %v481, %v480
    %v485 = vpack.i.b16 %v464, %v439
    %v486 = vshrl.u32 %v439, 16
    %v487 = vshrl.u32 %v464, 16
    %v488 = vpack.i.b16 %v487, %v486
    %489 = vrot.lane.b32.xlu0 %v470, 16
    %v490 = vpop.permute.xlu0 %489
    %491 = vrot.lane.b32.xlu0 %v473, 32
    %v492 = vpop.permute.xlu0 %491
    %493 = vrot.lane.b32.xlu0 %v476, 48
    %v494 = vpop.permute.xlu0 %493
    %495 = vrot.lane.b32.xlu0 %v479, 64
    %v496 = vpop.permute.xlu0 %495
    %497 = vrot.lane.b32.xlu0 %v482, 80
    %v498 = vpop.permute.xlu0 %497
    %499 = vrot.lane.b32.xlu0 %v485, 96
    %v500 = vpop.permute.xlu0 %499
    %501 = vrot.lane.b32.xlu0 %v488, 112
    %v502 = vpop.permute.xlu0 %501
    %v505 = vsel %vm312, %v467, %v490
    %vm506 = vcmask 261120
    %v508 = vsel %vm506, %v505, %v492
    %vm509 = vcmask 392192
    %v511 = vsel %vm509, %v508, %v494
    %v513 = vsel %vm81, %v511, %v496
    %vm514 = vcmask 654336
    %v516 = vsel %vm514, %v513, %v498
    %vm517 = vcmask 785408
    %v519 = vsel %vm517, %v516, %v500
    %vm520 = vcmask 916480
    %v522 = vsel %vm520, %v519, %v502
    %524 = vst [vmem:[#allocation8] sm:$0x1] %v522
    %v525 = vsel %vm409, 0.0, %v407
    %v526 = vsel %vm410, 0.0, %v408
    %v527 = vsub.f32 %v395, %v525
    %v528 = vsub.f32 %v396, %v526
    %v529 = vmul.f32 %v527, 0.5
    %v530 = vmul.f32 %v528, 0.5
    %v531 = vadd.f32 %v525, %v529
    %v532 = vadd.f32 %v526, %v530
    %vm533 = vcmp.ge.f32.partialorder %v531, 0.5
    %vm534 = vcmp.ge.f32.partialorder %v532, 0.5
    %v535 = vsel %vm533, 1, 0
    %v536 = vsel %vm534, 1, 0
    %v537 = vcvt.s32.f32 %v535
    %v538 = vcvt.s32.f32 %v536
    %v539 = vpack.c.bf16 %v537, %v537
    %v541 = vunpack.c.l.s4 1983009808
    %v542 = vunpack.c.0.s8 %v541
    %v543 = vlaneseq
    %v544 = vshrl.u32 %v543, 7
    %v545 = vsub.s32 %v542, %v544
    %v546 = vrot.slane %v539, %v545
    %v547 = vcombine.high %v546, 0
    %v549 = vunpack.c.l.s4 1934713408
    %v550 = vunpack.c.0.s8 %v549
    %v551 = vlaneseq
    %v552 = vshrl.u32 %v551, 7
    %v553 = vsub.s32 %v550, %v552
    %v554 = vrot.slane %v546, %v553
    %v556 = vunpack.c.l.s4 1934713408
    %v557 = vunpack.c.0.s8 %v556
    %v558 = vlaneseq
    %v559 = vshrl.u32 %v558, 7
    %v560 = vsub.s32 %v557, %v559
    %v561 = vrot.slane %v547, %v560
    %v562 = vcombine.high %v554, 0
    %v563 = vcombine.high %v561, 0
    %v564 = vpack.c.bf16 %v538, %v538
    %v566 = vunpack.c.l.s4 1983009808
    %v567 = vunpack.c.0.s8 %v566
    %v568 = vlaneseq
    %v569 = vshrl.u32 %v568, 7
    %v570 = vsub.s32 %v567, %v569
    %v571 = vrot.slane %v564, %v570
    %v572 = vcombine.high %v571, 0
    %v574 = vunpack.c.l.s4 1934713408
    %v575 = vunpack.c.0.s8 %v574
    %v576 = vlaneseq
    %v577 = vshrl.u32 %v576, 7
    %v578 = vsub.s32 %v575, %v577
    %v579 = vrot.slane %v571, %v578
    %v581 = vunpack.c.l.s4 1934713408
    %v582 = vunpack.c.0.s8 %v581
    %v583 = vlaneseq
    %v584 = vshrl.u32 %v583, 7
    %v585 = vsub.s32 %v582, %v584
    %v586 = vrot.slane %v572, %v585
    %v587 = vcombine.high %v579, 0
    %v588 = vcombine.high %v586, 0
    %v591 = vpack.i.b16 %v579, %v554
    %v592 = vshrl.u32 %v554, 16
    %v593 = vshrl.u32 %v579, 16
    %v594 = vpack.i.b16 %v593, %v592
    %v597 = vpack.i.b16 %v587, %v562
    %v598 = vshrl.u32 %v562, 16
    %v599 = vshrl.u32 %v587, 16
    %v600 = vpack.i.b16 %v599, %v598
    %v603 = vpack.i.b16 %v586, %v561
    %v604 = vshrl.u32 %v561, 16
    %v605 = vshrl.u32 %v586, 16
    %v606 = vpack.i.b16 %v605, %v604
    %v609 = vpack.i.b16 %v588, %v563
    %v610 = vshrl.u32 %v563, 16
    %v611 = vshrl.u32 %v588, 16
    %v612 = vpack.i.b16 %v611, %v610
    %613 = vrot.lane.b32.xlu0 %v594, 16
    %v614 = vpop.permute.xlu0 %613
    %615 = vrot.lane.b32.xlu0 %v597, 32
    %v616 = vpop.permute.xlu0 %615
    %617 = vrot.lane.b32.xlu0 %v600, 48
    %v618 = vpop.permute.xlu0 %617
    %619 = vrot.lane.b32.xlu0 %v603, 64
    %v620 = vpop.permute.xlu0 %619
    %621 = vrot.lane.b32.xlu0 %v606, 80
    %v622 = vpop.permute.xlu0 %621
    %623 = vrot.lane.b32.xlu0 %v609, 96
    %v624 = vpop.permute.xlu0 %623
    %625 = vrot.lane.b32.xlu0 %v612, 112
    %v626 = vpop.permute.xlu0 %625
    %v629 = vsel %vm312, %v591, %v614
    %v631 = vsel %vm506, %v629, %v616
    %v633 = vsel %vm509, %v631, %v618
    %v635 = vsel %vm81, %v633, %v620
    %v637 = vsel %vm514, %v635, %v622
    %v639 = vsel %vm517, %v637, %v624
    %v641 = vsel %vm520, %v639, %v626
    %s643 = scalar_lea.vmem [#allocation8], 1
    %644 = vst [vmem:[%s643] sm:$0x1] %v641
    %v645 = vsel %vm533, 0.0, %v531
    %v646 = vsel %vm534, 0.0, %v532
    %v647 = vsub.f32 %v397, %v645
    %v648 = vsub.f32 %v398, %v646
    %v649 = vmul.f32 %v647, 0.5
    %v650 = vmul.f32 %v648, 0.5
    %v651 = vadd.f32 %v645, %v649
    %v652 = vadd.f32 %v646, %v650
    %vm653 = vcmp.ge.f32.partialorder %v651, 0.5
    %vm654 = vcmp.ge.f32.partialorder %v652, 0.5
    %v655 = vsel %vm653, 1, 0
    %v656 = vsel %vm654, 1, 0
    %v657 = vcvt.s32.f32 %v655
    %v658 = vcvt.s32.f32 %v656
    %v659 = vpack.c.bf16 %v657, %v657
    %v661 = vunpack.c.l.s4 1983009808
    %v662 = vunpack.c.0.s8 %v661
    %v663 = vlaneseq
    %v664 = vshrl.u32 %v663, 7
    %v665 = vsub.s32 %v662, %v664
    %v666 = vrot.slane %v659, %v665
    %v667 = vcombine.high %v666, 0
    %v669 = vunpack.c.l.s4 1934713408
    %v670 = vunpack.c.0.s8 %v669
    %v671 = vlaneseq
    %v672 = vshrl.u32 %v671, 7
    %v673 = vsub.s32 %v670, %v672
    %v674 = vrot.slane %v666, %v673
    %v676 = vunpack.c.l.s4 1934713408
    %v677 = vunpack.c.0.s8 %v676
    %v678 = vlaneseq
    %v679 = vshrl.u32 %v678, 7
    %v680 = vsub.s32 %v677, %v679
    %v681 = vrot.slane %v667, %v680
    %v682 = vcombine.high %v674, 0
    %v683 = vcombine.high %v681, 0
    %v684 = vpack.c.bf16 %v658, %v658
    %v686 = vunpack.c.l.s4 1983009808
    %v687 = vunpack.c.0.s8 %v686
    %v688 = vlaneseq
    %v689 = vshrl.u32 %v688, 7
    %v690 = vsub.s32 %v687, %v689
    %v691 = vrot.slane %v684, %v690
    %v692 = vcombine.high %v691, 0
    %v694 = vunpack.c.l.s4 1934713408
    %v695 = vunpack.c.0.s8 %v694
    %v696 = vlaneseq
    %v697 = vshrl.u32 %v696, 7
    %v698 = vsub.s32 %v695, %v697
    %v699 = vrot.slane %v691, %v698
    %v701 = vunpack.c.l.s4 1934713408
    %v702 = vunpack.c.0.s8 %v701
    %v703 = vlaneseq
    %v704 = vshrl.u32 %v703, 7
    %v705 = vsub.s32 %v702, %v704
    %v706 = vrot.slane %v692, %v705
    %v707 = vcombine.high %v699, 0
    %v708 = vcombine.high %v706, 0
    %v711 = vpack.i.b16 %v699, %v674
    %v712 = vshrl.u32 %v674, 16
    %v713 = vshrl.u32 %v699, 16
    %v714 = vpack.i.b16 %v713, %v712
    %v717 = vpack.i.b16 %v707, %v682
    %v718 = vshrl.u32 %v682, 16
    %v719 = vshrl.u32 %v707, 16
    %v720 = vpack.i.b16 %v719, %v718
    %v723 = vpack.i.b16 %v706, %v681
    %v724 = vshrl.u32 %v681, 16
    %v725 = vshrl.u32 %v706, 16
    %v726 = vpack.i.b16 %v725, %v724
    %v729 = vpack.i.b16 %v708, %v683
    %v730 = vshrl.u32 %v683, 16
    %v731 = vshrl.u32 %v708, 16
    %v732 = vpack.i.b16 %v731, %v730
    %733 = vrot.lane.b32.xlu0 %v714, 16
    %v734 = vpop.permute.xlu0 %733
    %735 = vrot.lane.b32.xlu0 %v717, 32
    %v736 = vpop.permute.xlu0 %735
    %737 = vrot.lane.b32.xlu0 %v720, 48
    %v738 = vpop.permute.xlu0 %737
    %739 = vrot.lane.b32.xlu0 %v723, 64
    %v740 = vpop.permute.xlu0 %739
    %741 = vrot.lane.b32.xlu0 %v726, 80
    %v742 = vpop.permute.xlu0 %741
    %743 = vrot.lane.b32.xlu0 %v729, 96
    %v744 = vpop.permute.xlu0 %743
    %745 = vrot.lane.b32.xlu0 %v732, 112
    %v746 = vpop.permute.xlu0 %745
    %v749 = vsel %vm312, %v711, %v734
    %v751 = vsel %vm506, %v749, %v736
    %v753 = vsel %vm509, %v751, %v738
    %v755 = vsel %vm81, %v753, %v740
    %v757 = vsel %vm514, %v755, %v742
    %v759 = vsel %vm517, %v757, %v744
    %v761 = vsel %vm520, %v759, %v746
    %s763 = scalar_lea.vmem [#allocation8], 2
    %764 = vst [vmem:[%s763] sm:$0x1] %v761
    %v765 = vsel %vm653, 0.0, %v651
    %v766 = vsel %vm654, 0.0, %v652
    %v767 = vsub.f32 %v399, %v765
    %v768 = vsub.f32 %v400, %v766
    %v769 = vmul.f32 %v767, 0.5
    %v770 = vmul.f32 %v768, 0.5
    %v771 = vadd.f32 %v765, %v769
    %v772 = vadd.f32 %v766, %v770
    %vm773 = vcmp.ge.f32.partialorder %v771, 0.5
    %vm774 = vcmp.ge.f32.partialorder %v772, 0.5
    %v775 = vsel %vm773, 1, 0
    %v776 = vsel %vm774, 1, 0
    %v777 = vcvt.s32.f32 %v775
    %v778 = vcvt.s32.f32 %v776
    %v779 = vpack.c.bf16 %v777, %v777
    %v781 = vunpack.c.l.s4 1983009808
    %v782 = vunpack.c.0.s8 %v781
    %v783 = vlaneseq
    %v784 = vshrl.u32 %v783, 7
    %v785 = vsub.s32 %v782, %v784
    %v786 = vrot.slane %v779, %v785
    %v787 = vcombine.high %v786, 0
    %v789 = vunpack.c.l.s4 1934713408
    %v790 = vunpack.c.0.s8 %v789
    %v791 = vlaneseq
    %v792 = vshrl.u32 %v791, 7
    %v793 = vsub.s32 %v790, %v792
    %v794 = vrot.slane %v786, %v793
    %v796 = vunpack.c.l.s4 1934713408
    %v797 = vunpack.c.0.s8 %v796
    %v798 = vlaneseq
    %v799 = vshrl.u32 %v798, 7
    %v800 = vsub.s32 %v797, %v799
    %v801 = vrot.slane %v787, %v800
    %v802 = vcombine.high %v794, 0
    %v803 = vcombine.high %v801, 0
    %v804 = vpack.c.bf16 %v778, %v778
    %v806 = vunpack.c.l.s4 1983009808
    %v807 = vunpack.c.0.s8 %v806
    %v808 = vlaneseq
    %v809 = vshrl.u32 %v808, 7
    %v810 = vsub.s32 %v807, %v809
    %v811 = vrot.slane %v804, %v810
    %v812 = vcombine.high %v811, 0
    %v814 = vunpack.c.l.s4 1934713408
    %v815 = vunpack.c.0.s8 %v814
    %v816 = vlaneseq
    %v817 = vshrl.u32 %v816, 7
    %v818 = vsub.s32 %v815, %v817
    %v819 = vrot.slane %v811, %v818
    %v821 = vunpack.c.l.s4 1934713408
    %v822 = vunpack.c.0.s8 %v821
    %v823 = vlaneseq
    %v824 = vshrl.u32 %v823, 7
    %v825 = vsub.s32 %v822, %v824
    %v826 = vrot.slane %v812, %v825
    %v827 = vcombine.high %v819, 0
    %v828 = vcombine.high %v826, 0
    %v831 = vpack.i.b16 %v819, %v794
    %v832 = vshrl.u32 %v794, 16
    %v833 = vshrl.u32 %v819, 16
    %v834 = vpack.i.b16 %v833, %v832
    %v837 = vpack.i.b16 %v827, %v802
    %v838 = vshrl.u32 %v802, 16
    %v839 = vshrl.u32 %v827, 16
    %v840 = vpack.i.b16 %v839, %v838
    %v843 = vpack.i.b16 %v826, %v801
    %v844 = vshrl.u32 %v801, 16
    %v845 = vshrl.u32 %v826, 16
    %v846 = vpack.i.b16 %v845, %v844
    %v849 = vpack.i.b16 %v828, %v803
    %v850 = vshrl.u32 %v803, 16
    %v851 = vshrl.u32 %v828, 16
    %v852 = vpack.i.b16 %v851, %v850
    %853 = vrot.lane.b32.xlu0 %v834, 16
    %v854 = vpop.permute.xlu0 %853
    %855 = vrot.lane.b32.xlu0 %v837, 32
    %v856 = vpop.permute.xlu0 %855
    %857 = vrot.lane.b32.xlu0 %v840, 48
    %v858 = vpop.permute.xlu0 %857
    %859 = vrot.lane.b32.xlu0 %v843, 64
    %v860 = vpop.permute.xlu0 %859
    %861 = vrot.lane.b32.xlu0 %v846, 80
    %v862 = vpop.permute.xlu0 %861
    %863 = vrot.lane.b32.xlu0 %v849, 96
    %v864 = vpop.permute.xlu0 %863
    %865 = vrot.lane.b32.xlu0 %v852, 112
    %v866 = vpop.permute.xlu0 %865
    %v869 = vsel %vm312, %v831, %v854
    %v871 = vsel %vm506, %v869, %v856
    %v873 = vsel %vm509, %v871, %v858
    %v875 = vsel %vm81, %v873, %v860
    %v877 = vsel %vm514, %v875, %v862
    %v879 = vsel %vm517, %v877, %v864
    %v881 = vsel %vm520, %v879, %v866
    %s883 = scalar_lea.vmem [#allocation8], 3
    %884 = vst [vmem:[%s883] sm:$0x1] %v881
    %v885 = vsel %vm773, 0.0, %v771
    %v886 = vsel %vm774, 0.0, %v772
    %887 = vst.msk [vmem:[#allocation2] sm:$0xff] %vm312, %v885
    %888 = vst.msk [vmem:[#allocation2 + $0x8] sm:$0xff] %vm312, %v886
    // Predicated region
    $region22: #{tpu_custom_call.1} parent=1 // pred_check
      _
    $region23: #{tpu_custom_call.1} parent=1 // pred_check_branch
      %890 = sbr.rel (0) target = $region25
    $region24: #{tpu_custom_call.1} parent=1 // pred_region
      %s892 = ssub.s32 64, 64
      %893 = vsyncadd [#allocation5], %s892
      %s894 = sshll.u32 [#allocation8], 4
      %s895 = int_to_ptr.vmem [resolvable:$true] %s894
      %900 = dma.vmem_to_hbm [thread:$0]  %s895, 64, %s2, [#allocation5], 16, 16, 1
    $region25: #{tpu_custom_call.1} parent=1 // pred_fallthru
      _
    // Predicated region
    $region26: #{tpu_custom_call.1} parent=1 // pred_check
      _
    $region27: #{tpu_custom_call.1} parent=1 // pred_check_branch
      %902 = sbr.rel (0) target = $region29
    $region28: #{tpu_custom_call.1} parent=1 // pred_region
      %903 = dma.done [#allocation5], 64
    $region29: #{tpu_custom_call.1} parent=1 // pred_fallthru
      _
    %904 = vsyncpa [#allocation4], 1
    %905 = vsyncpa [#allocation7], 1
    %906 = vsyncpa [#allocation5], 1

</llo_original>
